<compile_context>
chip_gen: v5e
topology: v5e:2x2
jax: 0.10.0
libtpu: 0.0.40
codegen_flags: <defaults>
</compile_context>

<pallas_src>
import jax
import jax.numpy as jnp
from jax.experimental import pallas as pl
from jax.experimental.pallas import tpu as pltpu


def _round_up(n, m):
    return ((n + m - 1) // m) * m


def _logreg_kernel(x_ref, w_ref, b_ref, o_ref):
    # x_ref: (tile_b, D)      activation tile (f32 or bf16)
    # w_ref: (O_pad, D)       native PyTorch Linear layout (no transpose)
    # b_ref: (1, O_pad)       f32 bias
    # o_ref: (tile_b, O_pad)  f32 output tile (lane-dense)
    logits = jax.lax.dot_general(
        x_ref[...], w_ref[...],
        dimension_numbers=(((1,), (1,)), ((), ())),   # contract D with D (trans_b)
        preferred_element_type=jnp.float32,           # f32 accumulation on the MXU
    )
    o_ref[...] = jax.nn.sigmoid(logits + b_ref[...]).astype(o_ref.dtype)


def logistic_regression_forward(x, weight, bias, *, block_b=512, use_bf16=False):
    """sigmoid(x.reshape(B, -1) @ weight.T + bias).

    x: (B, ...) float; weight: (O, D) (PyTorch Linear layout); bias: (O,).
    """
    B = x.shape[0]
    x2d = x.reshape(B, -1)                 # same as torch reshape(B, -1)
    D = x2d.shape[1]
    O = weight.shape[0]

    # Lane-dense output: pad O up to a multiple of 128 (unmasked stores).
    O_pad = _round_up(max(O, 128), 128)

    # Batch tiling: one full-extent block for small B (always legal since
    # block == full array dim); otherwise 8-aligned tiles on a B grid.
    if B <= block_b:
        tile_b = B
        B_pad = B
    else:
        tile_b = block_b
        B_pad = _round_up(B, tile_b)
    grid_b = B_pad // tile_b

    mm_dtype = jnp.bfloat16 if use_bf16 else jnp.float32
    x_p = x2d.astype(mm_dtype)
    if B_pad != B:
        x_p = jnp.pad(x_p, ((0, B_pad - B), (0, 0)))
    w_p = weight.astype(mm_dtype)                       # native (O, D); no transpose
    if O_pad != O:
        w_p = jnp.pad(w_p, ((0, O_pad - O), (0, 0)))
    b_p = bias.astype(jnp.float32)
    if O_pad != O:
        b_p = jnp.pad(b_p, ((0, O_pad - O),))
    b_p = b_p.reshape(1, O_pad)

    # VMEM budget (v7x-safe, 64 MiB physical): double-buffered x/out tiles
    # + resident weight/bias, with headroom, capped well under 64 MiB.
    bytes_mm = jnp.dtype(mm_dtype).itemsize
    est = (2 * tile_b * D * bytes_mm        # activation tiles (double buffered)
           + 2 * tile_b * O_pad * 4         # output tiles (double buffered)
           + O_pad * D * bytes_mm           # resident weight
           + O_pad * 4)                     # resident bias
    vmem_limit = min(max(2 * est, 16 << 20), 48 << 20)

    out = pl.pallas_call(
        _logreg_kernel,
        out_shape=jax.ShapeDtypeStruct((B_pad, O_pad), jnp.float32),
        grid=(grid_b,),
        in_specs=[
            pl.BlockSpec((tile_b, D), lambda i: (i, 0)),   # streamed activations
            pl.BlockSpec((O_pad, D), lambda i: (0, 0)),    # weight resident in VMEM
            pl.BlockSpec((1, O_pad), lambda i: (0, 0)),    # bias resident in VMEM
        ],
        out_specs=pl.BlockSpec((tile_b, O_pad), lambda i: (i, 0)),
        compiler_params=pltpu.CompilerParams(
            dimension_semantics=("parallel",),   # batch axis -> both TCs on v7x
            vmem_limit_bytes=vmem_limit,
        ),
    )(x_p, w_p, b_p)

    return out[:B, :O]


def _reference(x, weight, bias):
    B = x.shape[0]
    x2d = x.reshape(B, -1)
    return jax.nn.sigmoid(x2d @ weight.T + bias)


if __name__ == "__main__":
    key = jax.random.PRNGKey(0)
    kx, kw, kb, kx2 = jax.random.split(key, 4)

    # Small shapes consistent with the module: image-like input flattened.
    B, C, H, W = 2, 4, 16, 16
    input_dim = C * H * W          # 1024
    output_dim = 10

    x = jax.random.normal(kx, (B, C, H, W), dtype=jnp.float32)
    # Deterministic init mimicking torch.nn.Linear default (uniform +/- 1/sqrt(D)).
    bound = 1.0 / (input_dim ** 0.5)
    weight = jax.random.uniform(kw, (output_dim, input_dim),
                                minval=-bound, maxval=bound, dtype=jnp.float32)
    bias = jax.random.uniform(kb, (output_dim,),
                              minval=-bound, maxval=bound, dtype=jnp.float32)

    # Case 1: tiny batch -> single full-extent block (f32 exact path).
    out = jax.block_until_ready(logistic_regression_forward(x, weight, bias))
    ref = _reference(x, weight, bias)
    assert out.shape == (B, output_dim)
    assert jnp.allclose(out, ref, atol=1e-5, rtol=1e-5), "mismatch vs reference (small)"

    # Case 2: batch larger than the tile -> exercises the B-grid + padding path.
    B2 = 20
    x2 = jax.random.normal(kx2, (B2, C, H, W), dtype=jnp.float32)
    out2 = jax.block_until_ready(
        logistic_regression_forward(x2, weight, bias, block_b=8))
    ref2 = _reference(x2, weight, bias)
    assert out2.shape == (B2, output_dim)
    assert jnp.allclose(out2, ref2, atol=1e-5, rtol=1e-5), "mismatch vs reference (tiled)"

    # Case 3: bf16 matmul inputs (v6e/v7x memory-traffic lever), f32 accumulate.
    out3 = jax.block_until_ready(
        logistic_regression_forward(x, weight, bias, use_bf16=True))
    assert jnp.allclose(out3, ref, atol=1e-2, rtol=1e-2), "mismatch vs reference (bf16)"

    print("KERNEL_OK")
</pallas_src>

<mosaic_0001>
module attributes {stable_mosaic.version = 11 : i64} {
  func.func @_logreg_kernel(%arg0: i32, %arg1: memref<2x1024xf32, #tpu.memory_space<vmem>>, %arg2: memref<128x1024xf32, #tpu.memory_space<vmem>>, %arg3: memref<1x128xf32, #tpu.memory_space<vmem>>, %arg4: memref<2x128xf32, #tpu.memory_space<vmem>>) attributes {dimension_semantics = [#tpu.dimension_semantics<parallel>], iteration_bounds = array<i64: 1>, scalar_prefetch = 0 : i64, scratch_operands = 0 : i64, tpu.core_type = #tpu.core_type<tc>, window_params = [{transform_indices = @transform_0, window_bounds = array<i64: 2, 1024>}, {pipeline_mode = #tpu.pipeline_mode<synchronous>, transform_indices = @transform_1, window_bounds = array<i64: 128, 1024>}, {pipeline_mode = #tpu.pipeline_mode<synchronous>, transform_indices = @transform_2, window_bounds = array<i64: 1, 128>}, {transform_indices = @transform_3, window_bounds = array<i64: 2, 128>}]} {
    %c0 = arith.constant 0 : index
    %c0_0 = arith.constant 0 : index
    %0 = vector.load %arg1[%c0, %c0_0] : memref<2x1024xf32, #tpu.memory_space<vmem>>, vector<2x1024xf32>
    %c0_1 = arith.constant 0 : index
    %c0_2 = arith.constant 0 : index
    %1 = vector.load %arg2[%c0_1, %c0_2] : memref<128x1024xf32, #tpu.memory_space<vmem>>, vector<128x1024xf32>
    %cst = arith.constant dense<0.000000e+00> : vector<2x128xf32>
    %2 = tpu.matmul %0, %1, %cst {dimension_numbers = #tpu.dot_dimension_numbers<[1], [1], [0], [0], [0, 0, 1, 0], [], []>} : vector<2x1024xf32>, vector<128x1024xf32>, vector<2x128xf32> -> vector<2x128xf32>
    %c0_3 = arith.constant 0 : index
    %c0_4 = arith.constant 0 : index
    %3 = vector.load %arg3[%c0_3, %c0_4] : memref<1x128xf32, #tpu.memory_space<vmem>>, vector<1x128xf32>
    %4 = vector.broadcast %3 : vector<1x128xf32> to vector<2x128xf32>
    %5 = arith.addf %2, %4 : vector<2x128xf32>
    %6 = arith.negf %5 : vector<2x128xf32>
    %7 = math.exp %6 : vector<2x128xf32>
    %cst_5 = arith.constant 1.000000e+00 : f32
    %8 = vector.broadcast %cst_5 : f32 to vector<2x128xf32>
    %9 = arith.addf %8, %7 : vector<2x128xf32>
    %10 = arith.divf %8, %9 : vector<2x128xf32>
    %c0_6 = arith.constant 0 : index
    %c0_7 = arith.constant 0 : index
    %11 = vector.load %arg4[%c0_6, %c0_7] : memref<2x128xf32, #tpu.memory_space<vmem>>, vector<2x128xf32>
    tpu.vector_store %arg4[%c0_6, %c0_7], %10 {strides = array<i32>} : memref<2x128xf32, #tpu.memory_space<vmem>>, vector<2x128xf32>,
    return
  }
  func.func @transform_0(%arg0: i32) -> (i32, i32) {
    %c0_i32 = arith.constant 0 : i32
    %c0_i32_0 = arith.constant 0 : i32
    return %arg0, %c0_i32 : i32, i32
  }
  func.func @transform_1(%arg0: i32) -> (i32, i32) {
    %c0_i32 = arith.constant 0 : i32
    %c0_i32_0 = arith.constant 0 : i32
    %c0_i32_1 = arith.constant 0 : i32
    return %c0_i32, %c0_i32_0 : i32, i32
  }
  func.func @transform_2(%arg0: i32) -> (i32, i32) {
    %c0_i32 = arith.constant 0 : i32
    %c0_i32_0 = arith.constant 0 : i32
    %c0_i32_1 = arith.constant 0 : i32
    return %c0_i32, %c0_i32_0 : i32, i32
  }
  func.func @transform_3(%arg0: i32) -> (i32, i32) {
    %c0_i32 = arith.constant 0 : i32
    %c0_i32_0 = arith.constant 0 : i32
    return %arg0, %c0_i32 : i32, i32
  }
}

</mosaic_0001>

<llo_original>
// kernel: tpu_custom_call.1
$region0: #{tpu_custom_call.1}
  #allocation0 [shape = 'u32[]', space=smem, size = 0x4, offset = 0x4, fixed_abs, tag = 'smem constant byte address 0x4 - core index']
  #allocation1 [shape = 'u32[72,128]{1,0:T(1,128)}', space=vmem, size = 0x9000, scoped, tag = 'internal scratch']
  %s0 = inlined_call_operand.hbm [shape: f32[2,1024], index: 0, kind: input, shape index: {}]
  %s1 = inlined_call_operand.hbm [shape: f32[128,1024], index: 1, kind: input, shape index: {}]
  %s2 = inlined_call_operand.vmem [shape: f32[1,128], index: 2, kind: input, shape index: {}]
  %s3 = inlined_call_operand.hbm [shape: f32[2,128], index: 3, kind: output, shape index: {}]
  %s4 = sld [smem:[#allocation0]]
  $region30: #{tpu_custom_call.1} parent=0
    _
  %s6 = ssub.s32 1, %s4
  %s7 = scalar_select 0, %s6, %s4
  $region1: #{tpu_custom_call.1} parent=0
    #allocation2 [shape = 'u8[8192]{0}', space=vmem, size = 0x2000, scoped, tag = 'input window, operand 0, single buffered']
    #allocation3 [shape = 's32[1]{0}', space=sflag, size = 0x4, scoped, tag = 'scoped memory for tpu_custom_call.1']
    #allocation4 [shape = 's32[1]{0}', space=sflag, size = 0x4, scoped, tag = 'scoped memory for tpu_custom_call.1']
    #allocation5 [shape = 'u8[524288]{0}', space=vmem, size = 0x80000, scoped, tag = 'input window, operand 1, single buffered']
    #allocation6 [shape = 's32[1]{0}', space=sflag, size = 0x4, scoped, tag = 'scoped memory for tpu_custom_call.1']
    #allocation7 [shape = 'u8[1024]{0}', space=vmem, size = 0x400, scoped, tag = 'output window, operand 0, single buffered']
    %8 = vsyncpa [#allocation3], 0
    %9 = vsyncpa [#allocation6], 0
    %10 = vsyncpa [#allocation4], 0
    // Predicated region
    $region2: #{tpu_custom_call.1} parent=1 // pred_check
      _
    $region3: #{tpu_custom_call.1} parent=1 // pred_check_branch
      %12 = sbr.rel (0) target = $region5
    $region4: #{tpu_custom_call.1} parent=1 // pred_region
      %14 = vsyncadd [#allocation3], 0
      %s16 = sshll.u32 %s0, 4
      %s17 = int_to_ptr.hbm [resolvable:$true] %s16
      %s18 = sshll.u32 [#allocation2], 4
      %s19 = int_to_ptr.vmem [resolvable:$true] %s18
      %21 = dma.hbm_to_vmem [thread:$0]  %s17, 256, %s19, [#allocation3]
    $region5: #{tpu_custom_call.1} parent=1 // pred_fallthru
      _
    // Predicated region
    $region6: #{tpu_custom_call.1} parent=1 // pred_check
      _
    $region7: #{tpu_custom_call.1} parent=1 // pred_check_branch
      %23 = sbr.rel (0) target = $region9
    $region8: #{tpu_custom_call.1} parent=1 // pred_region
      %25 = vsyncadd [#allocation6], 0
      %s26 = sshll.u32 %s1, 4
      %s27 = int_to_ptr.hbm [resolvable:$true] %s26
      %s28 = sshll.u32 [#allocation5], 4
      %s29 = int_to_ptr.vmem [resolvable:$true] %s28
      %34 = dma.hbm_to_vmem [thread:$0]  %s27, 16384, %s29, [#allocation6], 1024, 1024, 64
    $region9: #{tpu_custom_call.1} parent=1 // pred_fallthru
      _
    // Predicated region
    $region10: #{tpu_custom_call.1} parent=1 // pred_check
      _
    $region11: #{tpu_custom_call.1} parent=1 // pred_check_branch
      %36 = sbr.rel (0) target = $region13
    $region12: #{tpu_custom_call.1} parent=1 // pred_region
      _
    $region13: #{tpu_custom_call.1} parent=1 // pred_fallthru
      _
    // Predicated region
    $region14: #{tpu_custom_call.1} parent=1 // pred_check
      _
    $region15: #{tpu_custom_call.1} parent=1 // pred_check_branch
      %38 = sbr.rel (0) target = $region17
    $region16: #{tpu_custom_call.1} parent=1 // pred_region
      %40 = dma.done [#allocation3], 256
    $region17: #{tpu_custom_call.1} parent=1 // pred_fallthru
      _
    // Predicated region
    $region18: #{tpu_custom_call.1} parent=1 // pred_check
      _
    $region19: #{tpu_custom_call.1} parent=1 // pred_check_branch
      %42 = sbr.rel (0) target = $region21
    $region20: #{tpu_custom_call.1} parent=1 // pred_region
      %44 = dma.done [#allocation6], 16384
    $region21: #{tpu_custom_call.1} parent=1 // pred_fallthru
      _
    %v45 = vld [vmem:[#allocation2] sm:$0xff]
    %v46 = vld [vmem:[#allocation2 + $0x8] sm:$0xff]
    %v47 = vld [vmem:[#allocation5] sm:$0xff]
    %v48 = vld [vmem:[#allocation5 + $0x8] sm:$0xff]
    %v49 = vld [vmem:[#allocation5 + $0x10] sm:$0xff]
    %v50 = vld [vmem:[#allocation5 + $0x18] sm:$0xff]
    %v51 = vld [vmem:[#allocation5 + $0x20] sm:$0xff]
    %v52 = vld [vmem:[#allocation5 + $0x28] sm:$0xff]
    %v53 = vld [vmem:[#allocation5 + $0x30] sm:$0xff]
    %v54 = vld [vmem:[#allocation5 + $0x38] sm:$0xff]
    %v55 = vld [vmem:[#allocation5 + $0x40] sm:$0xff]
    %v56 = vld [vmem:[#allocation5 + $0x48] sm:$0xff]
    %v57 = vld [vmem:[#allocation5 + $0x50] sm:$0xff]
    %v58 = vld [vmem:[#allocation5 + $0x58] sm:$0xff]
    %v59 = vld [vmem:[#allocation5 + $0x60] sm:$0xff]
    %v60 = vld [vmem:[#allocation5 + $0x68] sm:$0xff]
    %v61 = vld [vmem:[#allocation5 + $0x70] sm:$0xff]
    %v62 = vld [vmem:[#allocation5 + $0x78] sm:$0xff]
    %v63 = vld [vmem:[#allocation5 + $0x80] sm:$0xff]
    %v64 = vld [vmem:[#allocation5 + $0x88] sm:$0xff]
    %v65 = vld [vmem:[#allocation5 + $0x90] sm:$0xff]
    %v66 = vld [vmem:[#allocation5 + $0x98] sm:$0xff]
    %v67 = vld [vmem:[#allocation5 + $0xa0] sm:$0xff]
    %v68 = vld [vmem:[#allocation5 + $0xa8] sm:$0xff]
    %v69 = vld [vmem:[#allocation5 + $0xb0] sm:$0xff]
    %v70 = vld [vmem:[#allocation5 + $0xb8] sm:$0xff]
    %v71 = vld [vmem:[#allocation5 + $0xc0] sm:$0xff]
    %v72 = vld [vmem:[#allocation5 + $0xc8] sm:$0xff]
    %v73 = vld [vmem:[#allocation5 + $0xd0] sm:$0xff]
    %v74 = vld [vmem:[#allocation5 + $0xd8] sm:$0xff]
    %v75 = vld [vmem:[#allocation5 + $0xe0] sm:$0xff]
    %v76 = vld [vmem:[#allocation5 + $0xe8] sm:$0xff]
    %v77 = vld [vmem:[#allocation5 + $0xf0] sm:$0xff]
    %v78 = vld [vmem:[#allocation5 + $0xf8] sm:$0xff]
    %v79 = vld [vmem:[#allocation5 + $0x100] sm:$0xff]
    %v80 = vld [vmem:[#allocation5 + $0x108] sm:$0xff]
    %v81 = vld [vmem:[#allocation5 + $0x110] sm:$0xff]
    %v82 = vld [vmem:[#allocation5 + $0x118] sm:$0xff]
    %v83 = vld [vmem:[#allocation5 + $0x120] sm:$0xff]
    %v84 = vld [vmem:[#allocation5 + $0x128] sm:$0xff]
    %v85 = vld [vmem:[#allocation5 + $0x130] sm:$0xff]
    %v86 = vld [vmem:[#allocation5 + $0x138] sm:$0xff]
    %v87 = vld [vmem:[#allocation5 + $0x140] sm:$0xff]
    %v88 = vld [vmem:[#allocation5 + $0x148] sm:$0xff]
    %v89 = vld [vmem:[#allocation5 + $0x150] sm:$0xff]
    %v90 = vld [vmem:[#allocation5 + $0x158] sm:$0xff]
    %v91 = vld [vmem:[#allocation5 + $0x160] sm:$0xff]
    %v92 = vld [vmem:[#allocation5 + $0x168] sm:$0xff]
    %v93 = vld [vmem:[#allocation5 + $0x170] sm:$0xff]
    %v94 = vld [vmem:[#allocation5 + $0x178] sm:$0xff]
    %v95 = vld [vmem:[#allocation5 + $0x180] sm:$0xff]
    %v96 = vld [vmem:[#allocation5 + $0x188] sm:$0xff]
    %v97 = vld [vmem:[#allocation5 + $0x190] sm:$0xff]
    %v98 = vld [vmem:[#allocation5 + $0x198] sm:$0xff]
    %v99 = vld [vmem:[#allocation5 + $0x1a0] sm:$0xff]
    %v100 = vld [vmem:[#allocation5 + $0x1a8] sm:$0xff]
    %v101 = vld [vmem:[#allocation5 + $0x1b0] sm:$0xff]
    %v102 = vld [vmem:[#allocation5 + $0x1b8] sm:$0xff]
    %v103 = vld [vmem:[#allocation5 + $0x1c0] sm:$0xff]
    %v104 = vld [vmem:[#allocation5 + $0x1c8] sm:$0xff]
    %v105 = vld [vmem:[#allocation5 + $0x1d0] sm:$0xff]
    %v106 = vld [vmem:[#allocation5 + $0x1d8] sm:$0xff]
    %v107 = vld [vmem:[#allocation5 + $0x1e0] sm:$0xff]
    %v108 = vld [vmem:[#allocation5 + $0x1e8] sm:$0xff]
    %v109 = vld [vmem:[#allocation5 + $0x1f0] sm:$0xff]
    %v110 = vld [vmem:[#allocation5 + $0x1f8] sm:$0xff]
    %v111 = vld [vmem:[#allocation5 + $0x200] sm:$0xff]
    %v112 = vld [vmem:[#allocation5 + $0x208] sm:$0xff]
    %v113 = vld [vmem:[#allocation5 + $0x210] sm:$0xff]
    %v114 = vld [vmem:[#allocation5 + $0x218] sm:$0xff]
    %v115 = vld [vmem:[#allocation5 + $0x220] sm:$0xff]
    %v116 = vld [vmem:[#allocation5 + $0x228] sm:$0xff]
    %v117 = vld [vmem:[#allocation5 + $0x230] sm:$0xff]
    %v118 = vld [vmem:[#allocation5 + $0x238] sm:$0xff]
    %v119 = vld [vmem:[#allocation5 + $0x240] sm:$0xff]
    %v120 = vld [vmem:[#allocation5 + $0x248] sm:$0xff]
    %v121 = vld [vmem:[#allocation5 + $0x250] sm:$0xff]
    %v122 = vld [vmem:[#allocation5 + $0x258] sm:$0xff]
    %v123 = vld [vmem:[#allocation5 + $0x260] sm:$0xff]
    %v124 = vld [vmem:[#allocation5 + $0x268] sm:$0xff]
    %v125 = vld [vmem:[#allocation5 + $0x270] sm:$0xff]
    %v126 = vld [vmem:[#allocation5 + $0x278] sm:$0xff]
    %v127 = vld [vmem:[#allocation5 + $0x280] sm:$0xff]
    %v128 = vld [vmem:[#allocation5 + $0x288] sm:$0xff]
    %v129 = vld [vmem:[#allocation5 + $0x290] sm:$0xff]
    %v130 = vld [vmem:[#allocation5 + $0x298] sm:$0xff]
    %v131 = vld [vmem:[#allocation5 + $0x2a0] sm:$0xff]
    %v132 = vld [vmem:[#allocation5 + $0x2a8] sm:$0xff]
    %v133 = vld [vmem:[#allocation5 + $0x2b0] sm:$0xff]
    %v134 = vld [vmem:[#allocation5 + $0x2b8] sm:$0xff]
    %v135 = vld [vmem:[#allocation5 + $0x2c0] sm:$0xff]
    %v136 = vld [vmem:[#allocation5 + $0x2c8] sm:$0xff]
    %v137 = vld [vmem:[#allocation5 + $0x2d0] sm:$0xff]
    %v138 = vld [vmem:[#allocation5 + $0x2d8] sm:$0xff]
    %v139 = vld [vmem:[#allocation5 + $0x2e0] sm:$0xff]
    %v140 = vld [vmem:[#allocation5 + $0x2e8] sm:$0xff]
    %v141 = vld [vmem:[#allocation5 + $0x2f0] sm:$0xff]
    %v142 = vld [vmem:[#allocation5 + $0x2f8] sm:$0xff]
    %v143 = vld [vmem:[#allocation5 + $0x300] sm:$0xff]
    %v144 = vld [vmem:[#allocation5 + $0x308] sm:$0xff]
    %v145 = vld [vmem:[#allocation5 + $0x310] sm:$0xff]
    %v146 = vld [vmem:[#allocation5 + $0x318] sm:$0xff]
    %v147 = vld [vmem:[#allocation5 + $0x320] sm:$0xff]
    %v148 = vld [vmem:[#allocation5 + $0x328] sm:$0xff]
    %v149 = vld [vmem:[#allocation5 + $0x330] sm:$0xff]
    %v150 = vld [vmem:[#allocation5 + $0x338] sm:$0xff]
    %v151 = vld [vmem:[#allocation5 + $0x340] sm:$0xff]
    %v152 = vld [vmem:[#allocation5 + $0x348] sm:$0xff]
    %v153 = vld [vmem:[#allocation5 + $0x350] sm:$0xff]
    %v154 = vld [vmem:[#allocation5 + $0x358] sm:$0xff]
    %v155 = vld [vmem:[#allocation5 + $0x360] sm:$0xff]
    %v156 = vld [vmem:[#allocation5 + $0x368] sm:$0xff]
    %v157 = vld [vmem:[#allocation5 + $0x370] sm:$0xff]
    %v158 = vld [vmem:[#allocation5 + $0x378] sm:$0xff]
    %v159 = vld [vmem:[#allocation5 + $0x380] sm:$0xff]
    %v160 = vld [vmem:[#allocation5 + $0x388] sm:$0xff]
    %v161 = vld [vmem:[#allocation5 + $0x390] sm:$0xff]
    %v162 = vld [vmem:[#allocation5 + $0x398] sm:$0xff]
    %v163 = vld [vmem:[#allocation5 + $0x3a0] sm:$0xff]
    %v164 = vld [vmem:[#allocation5 + $0x3a8] sm:$0xff]
    %v165 = vld [vmem:[#allocation5 + $0x3b0] sm:$0xff]
    %v166 = vld [vmem:[#allocation5 + $0x3b8] sm:$0xff]
    %v167 = vld [vmem:[#allocation5 + $0x3c0] sm:$0xff]
    %v168 = vld [vmem:[#allocation5 + $0x3c8] sm:$0xff]
    %v169 = vld [vmem:[#allocation5 + $0x3d0] sm:$0xff]
    %v170 = vld [vmem:[#allocation5 + $0x3d8] sm:$0xff]
    %v171 = vld [vmem:[#allocation5 + $0x3e0] sm:$0xff]
    %v172 = vld [vmem:[#allocation5 + $0x3e8] sm:$0xff]
    %v173 = vld [vmem:[#allocation5 + $0x3f0] sm:$0xff]
    %v174 = vld [vmem:[#allocation5 + $0x3f8] sm:$0xff]
    %v175 = vld [vmem:[%s2] sm:$0x1]
    %v177 = vperm.slane %v175, 0
    %181 = vst [vmem:[#allocation1] ss:$4 sm:$0xff] %v45
    %s182 = scalar_lea.vmem [#allocation1], 32
    %183 = vst [vmem:[%s182] ss:$4 sm:$0xff] %v46
    %v184 = vld.sshfl [vmem:[#allocation1] sm:$0xff pattern:$0x73625140]
    %v185 = vld.sshfl [vmem:[#allocation1 + $0x8] sm:$0xff pattern:$0x73625140]
    %v186 = vld.sshfl [vmem:[#allocation1 + $0x10] sm:$0xff pattern:$0x73625140]
    %v187 = vld.sshfl [vmem:[#allocation1 + $0x18] sm:$0xff pattern:$0x73625140]
    %v188 = vld.sshfl [vmem:[#allocation1 + $0x20] sm:$0xff pattern:$0x73625140]
    %v189 = vld.sshfl [vmem:[#allocation1 + $0x28] sm:$0xff pattern:$0x73625140]
    %v190 = vld.sshfl [vmem:[#allocation1 + $0x30] sm:$0xff pattern:$0x73625140]
    %v191 = vld.sshfl [vmem:[#allocation1 + $0x38] sm:$0xff pattern:$0x73625140]
    %200 = vmatpush.xpose.msra.mxu0 %v167
    %201 = vmatpush.xpose.msra.mxu0 %v159
    %202 = vmatpush.xpose.msra.mxu0 %v151
    %203 = vmatpush.xpose.msra.mxu0 %v143
    %204 = vmatpush.xpose.msra.mxu0 %v135
    %205 = vmatpush.xpose.msra.mxu0 %v127
    %206 = vmatpush.xpose.msra.mxu0 %v119
    %207 = vmatpush.xpose.msra.mxu0 %v111
    %208 = vmatpush.xpose.msra.mxu0 %v103
    %209 = vmatpush.xpose.msra.mxu0 %v95
    %210 = vmatpush.xpose.msra.mxu0 %v87
    %211 = vmatpush.xpose.msra.mxu0 %v79
    %212 = vmatpush.xpose.msra.mxu0 %v71
    %213 = vmatpush.xpose.msra.mxu0 %v63
    %214 = vmatpush.xpose.msra.mxu0 %v55
    %215 = vmatpush.xpose.msra.mxu0 %v47
    %216 = vmatmul.f32.gmra.mxu0 %v184
    %v217 = vpop.f32.mrf.mxu0
    %v218 = vadd.f32 %v177, %v217
    %219 = vdwg.mxu0
    %220 = vmatpush.xpose.msra.mxu0 %v168
    %221 = vmatpush.xpose.msra.mxu0 %v160
    %222 = vmatpush.xpose.msra.mxu0 %v152
    %223 = vmatpush.xpose.msra.mxu0 %v144
    %224 = vmatpush.xpose.msra.mxu0 %v136
    %225 = vmatpush.xpose.msra.mxu0 %v128
    %226 = vmatpush.xpose.msra.mxu0 %v120
    %227 = vmatpush.xpose.msra.mxu0 %v112
    %228 = vmatpush.xpose.msra.mxu0 %v104
    %229 = vmatpush.xpose.msra.mxu0 %v96
    %230 = vmatpush.xpose.msra.mxu0 %v88
    %231 = vmatpush.xpose.msra.mxu0 %v80
    %232 = vmatpush.xpose.msra.mxu0 %v72
    %233 = vmatpush.xpose.msra.mxu0 %v64
    %234 = vmatpush.xpose.msra.mxu0 %v56
    %235 = vmatpush.xpose.msra.mxu0 %v48
    %236 = vmatmul.f32.gmra.mxu0 %v185
    %v237 = vpop.f32.mrf.mxu0
    %v238 = vadd.f32 %v218, %v237
    %239 = vdwg.mxu0
    %240 = vmatpush.xpose.msra.mxu0 %v169
    %241 = vmatpush.xpose.msra.mxu0 %v161
    %242 = vmatpush.xpose.msra.mxu0 %v153
    %243 = vmatpush.xpose.msra.mxu0 %v145
    %244 = vmatpush.xpose.msra.mxu0 %v137
    %245 = vmatpush.xpose.msra.mxu0 %v129
    %246 = vmatpush.xpose.msra.mxu0 %v121
    %247 = vmatpush.xpose.msra.mxu0 %v113
    %248 = vmatpush.xpose.msra.mxu0 %v105
    %249 = vmatpush.xpose.msra.mxu0 %v97
    %250 = vmatpush.xpose.msra.mxu0 %v89
    %251 = vmatpush.xpose.msra.mxu0 %v81
    %252 = vmatpush.xpose.msra.mxu0 %v73
    %253 = vmatpush.xpose.msra.mxu0 %v65
    %254 = vmatpush.xpose.msra.mxu0 %v57
    %255 = vmatpush.xpose.msra.mxu0 %v49
    %256 = vmatmul.f32.gmra.mxu0 %v186
    %v257 = vpop.f32.mrf.mxu0
    %v258 = vadd.f32 %v238, %v257
    %259 = vdwg.mxu0
    %260 = vmatpush.xpose.msra.mxu0 %v170
    %261 = vmatpush.xpose.msra.mxu0 %v162
    %262 = vmatpush.xpose.msra.mxu0 %v154
    %263 = vmatpush.xpose.msra.mxu0 %v146
    %264 = vmatpush.xpose.msra.mxu0 %v138
    %265 = vmatpush.xpose.msra.mxu0 %v130
    %266 = vmatpush.xpose.msra.mxu0 %v122
    %267 = vmatpush.xpose.msra.mxu0 %v114
    %268 = vmatpush.xpose.msra.mxu0 %v106
    %269 = vmatpush.xpose.msra.mxu0 %v98
    %270 = vmatpush.xpose.msra.mxu0 %v90
    %271 = vmatpush.xpose.msra.mxu0 %v82
    %272 = vmatpush.xpose.msra.mxu0 %v74
    %273 = vmatpush.xpose.msra.mxu0 %v66
    %274 = vmatpush.xpose.msra.mxu0 %v58
    %275 = vmatpush.xpose.msra.mxu0 %v50
    %276 = vmatmul.f32.gmra.mxu0 %v187
    %v277 = vpop.f32.mrf.mxu0
    %v278 = vadd.f32 %v258, %v277
    %279 = vdwg.mxu0
    %280 = vmatpush.xpose.msra.mxu0 %v171
    %281 = vmatpush.xpose.msra.mxu0 %v163
    %282 = vmatpush.xpose.msra.mxu0 %v155
    %283 = vmatpush.xpose.msra.mxu0 %v147
    %284 = vmatpush.xpose.msra.mxu0 %v139
    %285 = vmatpush.xpose.msra.mxu0 %v131
    %286 = vmatpush.xpose.msra.mxu0 %v123
    %287 = vmatpush.xpose.msra.mxu0 %v115
    %288 = vmatpush.xpose.msra.mxu0 %v107
    %289 = vmatpush.xpose.msra.mxu0 %v99
    %290 = vmatpush.xpose.msra.mxu0 %v91
    %291 = vmatpush.xpose.msra.mxu0 %v83
    %292 = vmatpush.xpose.msra.mxu0 %v75
    %293 = vmatpush.xpose.msra.mxu0 %v67
    %294 = vmatpush.xpose.msra.mxu0 %v59
    %295 = vmatpush.xpose.msra.mxu0 %v51
    %296 = vmatmul.f32.gmra.mxu0 %v188
    %v297 = vpop.f32.mrf.mxu0
    %v298 = vadd.f32 %v278, %v297
    %299 = vdwg.mxu0
    %300 = vmatpush.xpose.msra.mxu0 %v172
    %301 = vmatpush.xpose.msra.mxu0 %v164
    %302 = vmatpush.xpose.msra.mxu0 %v156
    %303 = vmatpush.xpose.msra.mxu0 %v148
    %304 = vmatpush.xpose.msra.mxu0 %v140
    %305 = vmatpush.xpose.msra.mxu0 %v132
    %306 = vmatpush.xpose.msra.mxu0 %v124
    %307 = vmatpush.xpose.msra.mxu0 %v116
    %308 = vmatpush.xpose.msra.mxu0 %v108
    %309 = vmatpush.xpose.msra.mxu0 %v100
    %310 = vmatpush.xpose.msra.mxu0 %v92
    %311 = vmatpush.xpose.msra.mxu0 %v84
    %312 = vmatpush.xpose.msra.mxu0 %v76
    %313 = vmatpush.xpose.msra.mxu0 %v68
    %314 = vmatpush.xpose.msra.mxu0 %v60
    %315 = vmatpush.xpose.msra.mxu0 %v52
    %316 = vmatmul.f32.gmra.mxu0 %v189
    %v317 = vpop.f32.mrf.mxu0
    %v318 = vadd.f32 %v298, %v317
    %319 = vdwg.mxu0
    %320 = vmatpush.xpose.msra.mxu0 %v173
    %321 = vmatpush.xpose.msra.mxu0 %v165
    %322 = vmatpush.xpose.msra.mxu0 %v157
    %323 = vmatpush.xpose.msra.mxu0 %v149
    %324 = vmatpush.xpose.msra.mxu0 %v141
    %325 = vmatpush.xpose.msra.mxu0 %v133
    %326 = vmatpush.xpose.msra.mxu0 %v125
    %327 = vmatpush.xpose.msra.mxu0 %v117
    %328 = vmatpush.xpose.msra.mxu0 %v109
    %329 = vmatpush.xpose.msra.mxu0 %v101
    %330 = vmatpush.xpose.msra.mxu0 %v93
    %331 = vmatpush.xpose.msra.mxu0 %v85
    %332 = vmatpush.xpose.msra.mxu0 %v77
    %333 = vmatpush.xpose.msra.mxu0 %v69
    %334 = vmatpush.xpose.msra.mxu0 %v61
    %335 = vmatpush.xpose.msra.mxu0 %v53
    %336 = vmatmul.f32.gmra.mxu0 %v190
    %v337 = vpop.f32.mrf.mxu0
    %v338 = vadd.f32 %v318, %v337
    %339 = vdwg.mxu0
    %340 = vmatpush.xpose.msra.mxu0 %v174
    %341 = vmatpush.xpose.msra.mxu0 %v166
    %342 = vmatpush.xpose.msra.mxu0 %v158
    %343 = vmatpush.xpose.msra.mxu0 %v150
    %344 = vmatpush.xpose.msra.mxu0 %v142
    %345 = vmatpush.xpose.msra.mxu0 %v134
    %346 = vmatpush.xpose.msra.mxu0 %v126
    %347 = vmatpush.xpose.msra.mxu0 %v118
    %348 = vmatpush.xpose.msra.mxu0 %v110
    %349 = vmatpush.xpose.msra.mxu0 %v102
    %350 = vmatpush.xpose.msra.mxu0 %v94
    %351 = vmatpush.xpose.msra.mxu0 %v86
    %352 = vmatpush.xpose.msra.mxu0 %v78
    %353 = vmatpush.xpose.msra.mxu0 %v70
    %354 = vmatpush.xpose.msra.mxu0 %v62
    %355 = vmatpush.xpose.msra.mxu0 %v54
    %356 = vmatmul.f32.gmra.mxu0 %v191
    %v357 = vpop.f32.mrf.mxu0
    %v358 = vadd.f32 %v338, %v357
    %359 = vdwg.mxu0
    %v360 = vxor.u32 %v358, 2147483648
    %v361 = vmul.f32 %v360, 1.442695
    %v362 = vpow.pop %v361
    %v363 = vadd.f32 %v362, 1.0
    %v364 = vrcp.pop %v363
    %v365 = vmul.f32 %v363, %v364
    %v366 = vsub.f32 1.0, %v365
    %v367 = vmul.f32 %v364, %v366
    %v368 = vadd.f32 %v364, %v367
    %vm369 = vweird.f32 %v363
    %vm370 = vweird.f32 %v364
    %vm371 = vmor %vm369, %vm370
    %v372 = vsel %vm371, %v364, %v368
    %v373 = vand.u32 2147483647, %v363
    %vm374 = vcmp.eq.f32.partialorder %v373, 8.507059e+37
    %v375 = vand.u32 %v363, 2147483648
    %v376 = vor.u32 1.1754944e-38, %v375
    %v377 = vsel %vm374, %v376, %v372
    %v378 = vmul.f32 1.0, %v377
    %379 = vst [vmem:[#allocation7] sm:$0x3] %v378
    // Predicated region
    $region22: #{tpu_custom_call.1} parent=1 // pred_check
      _
    $region23: #{tpu_custom_call.1} parent=1 // pred_check_branch
      %381 = sbr.rel (0) target = $region25
    $region24: #{tpu_custom_call.1} parent=1 // pred_region
      %383 = vsyncadd [#allocation4], 0
      %s385 = sshll.u32 [#allocation7], 4
      %s386 = int_to_ptr.vmem [resolvable:$true] %s385
      %s387 = sshll.u32 %s3, 4
      %s388 = int_to_ptr.hbm [resolvable:$true] %s387
      %390 = dma.vmem_to_hbm [thread:$0]  %s386, 32, %s388, [#allocation4]
    $region25: #{tpu_custom_call.1} parent=1 // pred_fallthru
      _
    // Predicated region
    $region26: #{tpu_custom_call.1} parent=1 // pred_check
      _
    $region27: #{tpu_custom_call.1} parent=1 // pred_check_branch
      %392 = sbr.rel (0) target = $region29
    $region28: #{tpu_custom_call.1} parent=1 // pred_region
      %394 = dma.done [#allocation4], 32
    $region29: #{tpu_custom_call.1} parent=1 // pred_fallthru
      _
    %395 = vsyncpa [#allocation3], 1
    %396 = vsyncpa [#allocation6], 1
    %397 = vsyncpa [#allocation4], 1

</llo_original>
